<compile_context>
chip_gen: v7x
topology: tpu7x:2x2x1
jax: 0.10.0
libtpu: 0.0.40
codegen_flags: <defaults>
</compile_context>

<pallas_src>
import jax
import jax.numpy as jnp
from jax.experimental import pallas as pl
from jax.experimental.pallas import tpu as pltpu


def attention_kernel(feature_ref, hidden_ref, out_ref):
    # feature_ref: (TB, D), hidden_ref: (TB, L, D), out_ref: (TB, D)
    f = feature_ref[...].astype(jnp.float32)          # (TB, D)
    h = hidden_ref[...].astype(jnp.float32)           # (TB, L, D)

    # scores[b, l] = sum_d h[b, l, d] * f[b, d]   (VPU multiply + lane reduce)
    scores = jnp.sum(h * f[:, None, :], axis=-1)      # (TB, L)

    # softmax over L (per batch row), numerically stable
    m = jnp.max(scores, axis=-1, keepdims=True)        # (TB, 1)
    p = jnp.exp(scores - m)                            # (TB, L)
    denom = jnp.sum(p, axis=-1, keepdims=True)         # (TB, 1)
    # approx=False keeps the 1e-5 tolerance vs the reference exact.
    w = p * pl.reciprocal(denom, approx=False)         # (TB, L)

    # result[b, d] = sum_l w[b, l] * h[b, l, d]   (VPU multiply + sublane reduce)
    result = jnp.sum(w[:, :, None] * h, axis=1)         # (TB, D)
    out_ref[...] = result.astype(out_ref.dtype)


def _pick_tile_b(B, L, D, itemsize=4, budget_bytes=12 * 1024 * 1024):
    """Largest batch tile whose double-buffered VMEM footprint stays small
    enough for every TPU generation (v5e 16 MiB scoped default is the floor)."""
    per_b = 2 * (L * D + 2 * D) * itemsize   # double-buffered hidden + feature + out
    tb = max(1, budget_bytes // per_b)
    if tb >= B:
        return B                              # single block == full dim, always legal
    if tb >= 8:
        tb = (tb // 8) * 8                    # sublane-dense (multiple of 8) blocks
    return max(1, min(tb, 1024))


def attention_forward(feature, hidden, *, tile_b=None):
    """feature: (B, D), hidden: (B, L, D) -> (B, D)."""
    B, D = feature.shape
    _, L, _ = hidden.shape

    if tile_b is None:
        tile_b = _pick_tile_b(B, L, D, itemsize=feature.dtype.itemsize)
    tile_b = min(tile_b, B) if tile_b >= B else tile_b

    # Pad B so the grid tiles evenly; padded rows are benign (softmax of zeros)
    # and get sliced off below.
    num_blocks = pl.cdiv(B, tile_b)
    B_pad = num_blocks * tile_b
    if B_pad != B:
        feature = jnp.pad(feature, ((0, B_pad - B), (0, 0)))
        hidden = jnp.pad(hidden, ((0, B_pad - B), (0, 0), (0, 0)))

    out = pl.pallas_call(
        attention_kernel,
        out_shape=jax.ShapeDtypeStruct((B_pad, D), feature.dtype),
        grid_spec=pltpu.PrefetchScalarGridSpec(
            num_scalar_prefetch=0,
            grid=(num_blocks,),
            in_specs=[
                pl.BlockSpec((tile_b, D), lambda b: (b, 0)),
                pl.BlockSpec((tile_b, L, D), lambda b: (b, 0, 0)),
            ],
            out_specs=pl.BlockSpec((tile_b, D), lambda b: (b, 0)),
        ),
        compiler_params=pltpu.CompilerParams(
            # Batch blocks are independent -> shards across v7x's 2 TensorCores.
            dimension_semantics=("parallel",),
        ),
    )(feature, hidden)

    return out[:B]


def attention_ref(feature, hidden):
    """Pure-JAX reference mirroring the PyTorch forward."""
    B = feature.shape[0]
    f = feature.reshape(B, -1, 1)                      # (B, D, 1)
    ratio = jnp.einsum("bld,bdz->blz", hidden, f)      # (B, L, 1)
    ratio = ratio.reshape(B, -1)                       # (B, L)
    w = jax.nn.softmax(ratio, axis=1).reshape(B, -1, 1)
    result = jnp.einsum("bdl,blz->bdz",
                        jnp.transpose(hidden, (0, 2, 1)), w)  # (B, D, 1)
    return result.reshape(B, -1)


if __name__ == "__main__":
    # The module has no parameters; only construct inputs.
    key = jax.random.PRNGKey(0)
    k1, k2 = jax.random.split(key)

    B, L, D = 2, 8, 32
    feature = jax.random.normal(k1, (B, D), dtype=jnp.float32)
    hidden = jax.random.normal(k2, (B, L, D), dtype=jnp.float32)

    out = attention_forward(feature, hidden)
    out = jax.block_until_ready(out)

    ref = attention_ref(feature, hidden)
    assert out.shape == (B, D)
    assert jnp.allclose(out, ref, atol=1e-5, rtol=1e-5), (
        f"max abs err {jnp.max(jnp.abs(out - ref))}"
    )
    print("KERNEL_OK")
</pallas_src>

<mosaic_0001>
module attributes {stable_mosaic.version = 11 : i64} {
  func.func @attention_kernel(%arg0: i32, %arg1: memref<2x32xf32, #tpu.memory_space<vmem>>, %arg2: memref<2x8x32xf32, #tpu.memory_space<vmem>>, %arg3: memref<2x32xf32, #tpu.memory_space<vmem>>) attributes {dimension_semantics = [#tpu.dimension_semantics<parallel>], iteration_bounds = array<i64: 1>, scalar_prefetch = 0 : i64, scratch_operands = 0 : i64, tpu.core_type = #tpu.core_type<tc>, window_params = [{transform_indices = @transform_0, window_bounds = array<i64: 2, 32>}, {transform_indices = @transform_1, window_bounds = array<i64: 2, 8, 32>}, {transform_indices = @transform_2, window_bounds = array<i64: 2, 32>}]} {
    %c0 = arith.constant 0 : index
    %c0_0 = arith.constant 0 : index
    %0 = vector.load %arg1[%c0, %c0_0] : memref<2x32xf32, #tpu.memory_space<vmem>>, vector<2x32xf32>
    %c0_1 = arith.constant 0 : index
    %c0_2 = arith.constant 0 : index
    %c0_3 = arith.constant 0 : index
    %1 = vector.load %arg2[%c0_1, %c0_2, %c0_3] : memref<2x8x32xf32, #tpu.memory_space<vmem>>, vector<2x8x32xf32>
    %2 = vector.shape_cast %0 : vector<2x32xf32> to vector<2x1x32xf32>
    %3 = vector.broadcast %2 : vector<2x1x32xf32> to vector<2x8x32xf32>
    %4 = arith.mulf %1, %3 : vector<2x8x32xf32>
    %cst = arith.constant dense<0.000000e+00> : vector<2x8xf32>
    %5 = vector.multi_reduction <add>, %4, %cst [2] : vector<2x8x32xf32> to vector<2x8xf32>
    %cst_4 = arith.constant dense<0xFF800000> : vector<2xf32>
    %6 = vector.multi_reduction <maximumf>, %5, %cst_4 [1] : vector<2x8xf32> to vector<2xf32>
    %7 = vector.shape_cast %6 : vector<2xf32> to vector<2x1xf32>
    %8 = vector.broadcast %7 : vector<2x1xf32> to vector<2x8xf32>
    %9 = arith.subf %5, %8 : vector<2x8xf32>
    %10 = math.exp %9 : vector<2x8xf32>
    %cst_5 = arith.constant dense<0.000000e+00> : vector<2xf32>
    %11 = vector.multi_reduction <add>, %10, %cst_5 [1] : vector<2x8xf32> to vector<2xf32>
    %12 = vector.shape_cast %11 : vector<2xf32> to vector<2x1xf32>
    %13 = tpu.reciprocal %12 : vector<2x1xf32> -> vector<2x1xf32>
    %14 = vector.broadcast %13 : vector<2x1xf32> to vector<2x8xf32>
    %15 = arith.mulf %10, %14 : vector<2x8xf32>
    %16 = vector.shape_cast %15 : vector<2x8xf32> to vector<2x8x1xf32>
    %17 = vector.broadcast %16 : vector<2x8x1xf32> to vector<2x8x32xf32>
    %18 = arith.mulf %17, %1 : vector<2x8x32xf32>
    %cst_6 = arith.constant dense<0.000000e+00> : vector<2x32xf32>
    %19 = vector.multi_reduction <add>, %18, %cst_6 [1] : vector<2x8x32xf32> to vector<2x32xf32>
    %c0_7 = arith.constant 0 : index
    %c0_8 = arith.constant 0 : index
    %20 = vector.load %arg3[%c0_7, %c0_8] : memref<2x32xf32, #tpu.memory_space<vmem>>, vector<2x32xf32>
    tpu.vector_store %arg3[%c0_7, %c0_8], %19 {strides = array<i32>} : memref<2x32xf32, #tpu.memory_space<vmem>>, vector<2x32xf32>,
    return
  }
  func.func @transform_0(%arg0: i32) -> (i32, i32) {
    %c0_i32 = arith.constant 0 : i32
    %c0_i32_0 = arith.constant 0 : i32
    return %arg0, %c0_i32 : i32, i32
  }
  func.func @transform_1(%arg0: i32) -> (i32, i32, i32) {
    %c0_i32 = arith.constant 0 : i32
    %c0_i32_0 = arith.constant 0 : i32
    %c0_i32_1 = arith.constant 0 : i32
    return %arg0, %c0_i32, %c0_i32_0 : i32, i32, i32
  }
  func.func @transform_2(%arg0: i32) -> (i32, i32) {
    %c0_i32 = arith.constant 0 : i32
    %c0_i32_0 = arith.constant 0 : i32
    return %arg0, %c0_i32 : i32, i32
  }
}

</mosaic_0001>

<llo_original>
// kernel: tpu_custom_call.1
$region0: #{tpu_custom_call.1}
  #allocation0 [shape = 'u32[]', space=smem, size = 0x4, offset = 0x4, fixed_abs, tag = 'smem constant byte address 0x4 - core index']
  #allocation1 [shape = 'u32[144,128]{1,0:T(1,128)}', space=vmem, size = 0x12000, scoped, tag = 'internal scratch']
  %s0 = inlined_call_operand.hbm [shape: f32[2,32], index: 0, kind: input, shape index: {}]
  %s1 = inlined_call_operand.hbm [shape: f32[2,8,32], index: 1, kind: input, shape index: {}]
  %s2 = inlined_call_operand.hbm [shape: f32[2,32], index: 2, kind: output, shape index: {}]
  %s3 = sld [smem:[#allocation0]]
  $region26: #{tpu_custom_call.1} parent=0
    _
  %s5 = ssub.s32 1, %s3
  %s6 = scalar_select 0, %s5, %s3
  $region1: #{tpu_custom_call.1} parent=0
    #allocation2 [shape = 'u8[1024]{0}', space=vmem, size = 0x400, scoped, tag = 'input window, operand 0, single buffered']
    #allocation3 [shape = 's32[1]{0}', space=sflag, size = 0x4, scoped, tag = 'scoped memory for tpu_custom_call.1']
    #allocation4 [shape = 's32[1]{0}', space=sflag, size = 0x4, scoped, tag = 'scoped memory for tpu_custom_call.1']
    #allocation5 [shape = 'u8[8192]{0}', space=vmem, size = 0x2000, scoped, tag = 'input window, operand 1, single buffered']
    #allocation6 [shape = 's32[1]{0}', space=sflag, size = 0x4, scoped, tag = 'scoped memory for tpu_custom_call.1']
    #allocation7 [shape = 'u8[1024]{0}', space=vmem, size = 0x400, scoped, tag = 'output window, operand 0, single buffered']
    %7 = vsyncpa [#allocation3], 0
    %8 = vsyncpa [#allocation6], 0
    %9 = vsyncpa [#allocation4], 0
    // Predicated region
    $region2: #{tpu_custom_call.1} parent=1 // pred_check
      _
    $region3: #{tpu_custom_call.1} parent=1 // pred_check_branch
      %11 = sbr.rel (0) target = $region5
    $region4: #{tpu_custom_call.1} parent=1 // pred_region
      %s13 = ssub.s32 32, 32
      %14 = vsyncadd [#allocation3], %s13
      %s16 = sshll.u32 [#allocation2], 4
      %s17 = int_to_ptr.vmem [resolvable:$true] %s16
      %19 = dma.hbm_to_vmem [thread:$0]  %s0, 32, %s17, [#allocation3]
    $region5: #{tpu_custom_call.1} parent=1 // pred_fallthru
      _
    // Predicated region
    $region6: #{tpu_custom_call.1} parent=1 // pred_check
      _
    $region7: #{tpu_custom_call.1} parent=1 // pred_check_branch
      %21 = sbr.rel (0) target = $region9
    $region8: #{tpu_custom_call.1} parent=1 // pred_region
      %s23 = ssub.s32 256, 256
      %24 = vsyncadd [#allocation6], %s23
      %s25 = sshll.u32 [#allocation5], 4
      %s26 = int_to_ptr.vmem [resolvable:$true] %s25
      %31 = dma.hbm_to_vmem [thread:$0]  %s1, 256, %s26, [#allocation6], 128, 128, 8
    $region9: #{tpu_custom_call.1} parent=1 // pred_fallthru
      _
    // Predicated region
    $region10: #{tpu_custom_call.1} parent=1 // pred_check
      _
    $region11: #{tpu_custom_call.1} parent=1 // pred_check_branch
      %33 = sbr.rel (0) target = $region13
    $region12: #{tpu_custom_call.1} parent=1 // pred_region
      %34 = dma.done [#allocation3], 32
    $region13: #{tpu_custom_call.1} parent=1 // pred_fallthru
      _
    // Predicated region
    $region14: #{tpu_custom_call.1} parent=1 // pred_check
      _
    $region15: #{tpu_custom_call.1} parent=1 // pred_check_branch
      %36 = sbr.rel (0) target = $region17
    $region16: #{tpu_custom_call.1} parent=1 // pred_region
      %37 = dma.done [#allocation6], 256
    $region17: #{tpu_custom_call.1} parent=1 // pred_fallthru
      _
    %v38 = vld [vmem:[#allocation2] sm:$0x3]
    %v39 = vld [vmem:[#allocation5] sm:$0xff]
    %v40 = vld [vmem:[#allocation5 + $0x8] sm:$0xff]
    %v43 = vunpack.c.l.s4 1966171168
    %v44 = vunpack.c.0.s8 %v43
    %v45 = vlaneseq
    %v46 = vshrl.u32 %v45, 7
    %v47 = vsub.s32 %v44, %v46
    %v48 = vrot.slane %v38, %v47
    %v49 = vcombine.high %v48, %v48
    %v51 = vunpack.c.l.s4 1966171168
    %v52 = vunpack.c.0.s8 %v51
    %v53 = vlaneseq
    %v54 = vshrl.u32 %v53, 7
    %v55 = vsub.s32 %v52, %v54
    %v56 = vrot.slane %v48, %v55
    %v58 = vunpack.c.l.s4 1966171168
    %v59 = vunpack.c.0.s8 %v58
    %v60 = vlaneseq
    %v61 = vshrl.u32 %v60, 7
    %v62 = vsub.s32 %v59, %v61
    %v63 = vrot.slane %v49, %v62
    %v64 = vlaneseq
    %v65 = vshrl.u32 %v64, 7
    %v66 = vsub.s32 0, %v65
    %v67 = vrot.slane %v56, %v66
    %v68 = vlaneseq
    %v69 = vshrl.u32 %v68, 7
    %v70 = vsub.s32 0, %v69
    %v71 = vrot.slane %v63, %v70
    %v74 = vmul.f32 %v39, %v67
    %v75 = vmul.f32 %v40, %v71
    %vm76 = vcmask 261120
    %v77 = vsel %vm76, %v74, 0.0
    %78 = vadd.xlane.f32.xlu0 %v77
    %v79 = vpop.xlane.xlu0 %78
    %v80 = vsel %vm76, %v75, 0.0
    %81 = vadd.xlane.f32.xlu0 %v80
    %v82 = vpop.xlane.xlu0 %81
    %v85 = vlaneseq
    %v86 = vand.u32 %v85, 127
    %v87 = vlaneseq
    %v88 = vshrl.u32 %v87, 7
    %v89 = vsub.s32 %v86, %v88
    %v90 = vrot.slane %v79, %v89
    %v91 = vlaneseq
    %v92 = vshrl.u32 %v91, 7
    %v93 = vsub.s32 %v86, %v92
    %v94 = vrot.slane %v82, %v93
    %vm95 = vcmask 1041409
    %v96 = vsel %vm95, %v94, %v90
    %vm98 = vcmask 58368
    %v99 = vsel %vm98, %v96, -inf
    %100 = vmax.xlane.f32.xlu0 %v99
    %v101 = vpop.xlane.xlu0 %100
    %v103 = vlaneseq
    %v104 = vshrl.u32 %v103, 7
    %v105 = vsub.s32 0, %v104
    %v106 = vrot.slane %v101, %v105
    %v107 = vlaneseq
    %v108 = vshrl.u32 %v107, 7
    %v109 = vsub.s32 1, %v108
    %v110 = vrot.slane %v101, %v109
    %v113 = vsub.f32 %v79, %v106
    %v114 = vsub.f32 %v82, %v110
    %v115 = vmul.f32 %v113, 1.442695
    %v116 = vpow.pop %v115
    %v117 = vmul.f32 %v114, 1.442695
    %v118 = vpow.pop %v117
    %121 = vset.pattern.permute.xlu0 0
    %122 = vperm.xlu0 %121, %v116
    %v123 = vpop.permute.xlu0 %122
    %124 = vset.pattern.permute.xlu0 0
    %125 = vperm.xlu0 %124, %v118
    %v126 = vpop.permute.xlu0 %125
    %v127 = vlaneseq
    %v128 = vshrl.u32 %v127, 7
    %v129 = vsub.s32 %v86, %v128
    %v130 = vrot.slane %v123, %v129
    %v131 = vlaneseq
    %v132 = vshrl.u32 %v131, 7
    %v133 = vsub.s32 %v86, %v132
    %v134 = vrot.slane %v126, %v133
    %v135 = vsel %vm95, %v134, %v130
    %v137 = vsel %vm98, %v135, 0.0
    %138 = vadd.xlane.f32.xlu0 %v137
    %v139 = vpop.xlane.xlu0 %138
    %v140 = vrcp.pop %v139
    %v142 = vlaneseq
    %v143 = vshrl.u32 %v142, 7
    %v144 = vsub.s32 0, %v143
    %v145 = vrot.slane %v140, %v144
    %v146 = vlaneseq
    %v147 = vshrl.u32 %v146, 7
    %v148 = vsub.s32 1, %v147
    %v149 = vrot.slane %v140, %v148
    %v152 = vmul.f32 %v116, %v145
    %v153 = vmul.f32 %v118, %v149
    %155 = vset.pattern.permute.xlu0 0
    %156 = vperm.xlu0 %155, %v152
    %v157 = vpop.permute.xlu0 %156
    %160 = vset.pattern.permute.xlu0 0
    %161 = vperm.xlu0 %160, %v153
    %v162 = vpop.permute.xlu0 %161
    %v164 = vmul.f32 %v157, %v39
    %v165 = vmul.f32 %v162, %v40
    %v166 = vsel %vm76, %v164, 0.0
    %v167 = vrot.slane %v166, 4
    %v168 = vadd.f32 %v166, %v167
    %v169 = vrot.slane %v168, 2
    %v170 = vadd.f32 %v168, %v169
    %v171 = vrot.slane %v170, 1
    %v172 = vadd.f32 %v170, %v171
    %v173 = vsel %vm76, %v165, 0.0
    %v174 = vrot.slane %v173, 4
    %v175 = vadd.f32 %v173, %v174
    %v176 = vrot.slane %v175, 2
    %v177 = vadd.f32 %v175, %v176
    %v178 = vrot.slane %v177, 1
    %v179 = vadd.f32 %v177, %v178
    %v182 = vsel %vm95, %v179, %v172
    %vm184 = vcmask 254976
    %185 = vst.msk [vmem:[#allocation7] sm:$0x3] %vm184, %v182
    // Predicated region
    $region18: #{tpu_custom_call.1} parent=1 // pred_check
      _
    $region19: #{tpu_custom_call.1} parent=1 // pred_check_branch
      %187 = sbr.rel (0) target = $region21
    $region20: #{tpu_custom_call.1} parent=1 // pred_region
      %s189 = ssub.s32 32, 32
      %190 = vsyncadd [#allocation4], %s189
      %s192 = sshll.u32 [#allocation7], 4
      %s193 = int_to_ptr.vmem [resolvable:$true] %s192
      %195 = dma.vmem_to_hbm [thread:$0]  %s193, 32, %s2, [#allocation4]
    $region21: #{tpu_custom_call.1} parent=1 // pred_fallthru
      _
    // Predicated region
    $region22: #{tpu_custom_call.1} parent=1 // pred_check
      _
    $region23: #{tpu_custom_call.1} parent=1 // pred_check_branch
      %197 = sbr.rel (0) target = $region25
    $region24: #{tpu_custom_call.1} parent=1 // pred_region
      %198 = dma.done [#allocation4], 32
    $region25: #{tpu_custom_call.1} parent=1 // pred_fallthru
      _
    %199 = vsyncpa [#allocation3], 1
    %200 = vsyncpa [#allocation6], 1
    %201 = vsyncpa [#allocation4], 1

</llo_original>
